<compile_context>
chip_gen: v5e
topology: v5e:2x2
jax: 0.10.0
libtpu: 0.0.40
codegen_flags: <defaults>
</compile_context>

<pallas_src>
import functools

import jax
import jax.numpy as jnp
from jax.experimental import pallas as pl
from jax.experimental.pallas import tpu as pltpu


_VMEM_FALLBACK_BYTES = 48 * 1024 * 1024


def _vmem_limit_bytes():
    """~3/4 of the physical per-core VMEM (leaves headroom for compiler
    scratch): ~48 MiB on v7x (64 MiB/TC), ~96 MiB on v5e/v6e (128 MiB)."""
    cap = None
    try:
        info = pltpu.get_tpu_info()
        cap = getattr(info, "vmem_capacity_bytes", None)
    except Exception:
        cap = None
    if not cap:
        return _VMEM_FALLBACK_BYTES
    return int(cap) * 3 // 4


def _tile(dim, pref, align):
    """Largest tile <= pref that divides `dim` and is a multiple of `align`;
    retries with 8-alignment, then falls back to the full dimension (always a
    legal block shape)."""
    if dim <= pref:
        return dim
    for a in (align, 8):
        if a > pref:
            continue
        t = (pref // a) * a
        while t >= a:
            if dim % t == 0:
                return t
            t -= a
    return dim


# ----------------------------------------------------------------------------
# Conv1D kernel:  y = x @ W + b, K-tiled with an f32 accumulator.
# Used for both the fused qkv projection (W is (nx, 3*nx)) and c_proj.
# ----------------------------------------------------------------------------
def _matmul_bias_kernel(x_ref, w_ref, b_ref, o_ref, acc_ref, *, mxu_dtype):
    kk = pl.program_id(2)

    @pl.when(kk == 0)
    def _init():
        acc_ref[...] = jnp.zeros_like(acc_ref)

    acc_ref[...] += jnp.dot(
        x_ref[...].astype(mxu_dtype),
        w_ref[...].astype(mxu_dtype),
        preferred_element_type=jnp.float32)

    @pl.when(kk == pl.num_programs(2) - 1)
    def _finalize():
        o_ref[...] = (acc_ref[...] + b_ref[...].astype(jnp.float32)).astype(o_ref.dtype)


def conv1d(x2d, w, b, *, tm=1024, tn=1024, tk=512,
           mxu_dtype=jnp.bfloat16, out_dtype=None, vmem_limit=None):
    """x2d: (M, nx) @ w: (nx, nf) + b: (nf,) -> (M, nf) in out_dtype."""
    M, nx = x2d.shape
    nf = w.shape[-1]
    out_dtype = out_dtype or x2d.dtype
    vmem_limit = vmem_limit or _vmem_limit_bytes()
    tm = _tile(M, tm, 128)
    tn = _tile(nf, tn, 128)
    tk = _tile(nx, tk, 128)
    grid = (M // tm, nf // tn, nx // tk)
    # TODO(synk): on v7x, split the M-tile axis across the two TensorCores
    # (CORE_PARALLEL) once the codegen path is validated on single-core parts.
    return pl.pallas_call(
        functools.partial(_matmul_bias_kernel, mxu_dtype=mxu_dtype),
        out_shape=jax.ShapeDtypeStruct((M, nf), out_dtype),
        grid=grid,
        in_specs=[
            pl.BlockSpec((tm, tk), lambda i, j, k: (i, k)),
            pl.BlockSpec((tk, tn), lambda i, j, k: (k, j)),
            pl.BlockSpec((1, tn), lambda i, j, k: (0, j)),
        ],
        out_specs=pl.BlockSpec((tm, tn), lambda i, j, k: (i, j)),
        scratch_shapes=[pltpu.VMEM((tm, tn), jnp.float32)],
        compiler_params=pltpu.CompilerParams(
            dimension_semantics=("parallel", "parallel", "arbitrary"),
            vmem_limit_bytes=vmem_limit),
    )(x2d, w, b.reshape(1, nf))


# ----------------------------------------------------------------------------
# Flash-style causal attention over a (B, T, 3, nx) qkv tensor.
#   grid = (B, T//tq, T//tkv); all H heads handled per grid step.
#   q/k/v blocks are lane-dense (tile, nx) slabs; output is a lane-dense
#   (tq, nx) slab with heads already merged (merge_heads fused into the store).
# ----------------------------------------------------------------------------
def _attn_kernel(q_ref, k_ref, v_ref, o_ref, q_scr, m_ref, l_ref, acc_ref, *,
                 n_head, d_head, scale, mxu_dtype, tq, tkv):
    qi = pl.program_id(1)
    ki = pl.program_id(2)
    q_start = qi * tq
    k_start = ki * tkv

    @pl.when(ki == 0)
    def _init():
        m_ref[...] = jnp.full_like(m_ref, -jnp.inf)
        l_ref[...] = jnp.zeros_like(l_ref)
        acc_ref[...] = jnp.zeros_like(acc_ref)
        # Hoisted q scale + cast: done once per q tile, reused for all kv tiles.
        # Reference divides scores by d_head (w / v.size(-1)); fold into q.
        qs = q_ref[0, :, 0, :].astype(jnp.float32)
        if scale:
            qs = qs * (1.0 / d_head)
        q_scr[...] = qs.astype(mxu_dtype)

    def _body(apply_mask):
        q_slab = q_scr[...]          # (tq,  nx) scaled, mxu dtype
        k_slab = k_ref[0, :, 0, :]   # (tkv, nx)
        v_slab = v_ref[0, :, 0, :]   # (tkv, nx)
        if apply_mask:
            row = q_start + jax.lax.broadcasted_iota(jnp.int32, (tq, tkv), 0)
            col = k_start + jax.lax.broadcasted_iota(jnp.int32, (tq, tkv), 1)
            causal = col <= row
        # TODO(synk): if bundle dumps show vreg spills for large n_head,
        # restructure this head loop (grid axis or fori_loop over a head-major
        # scratch layout) instead of the static unroll.
        for h in range(n_head):
            lo, hi = h * d_head, (h + 1) * d_head
            q_h = q_slab[:, lo:hi]
            k_h = k_slab[:, lo:hi].astype(mxu_dtype)
            v_h = v_slab[:, lo:hi].astype(mxu_dtype)

            # q @ k^T without materializing a transposed K anywhere.
            s = jax.lax.dot_general(q_h, k_h, (((1,), (1,)), ((), ())),
                                    preferred_element_type=jnp.float32)
            if apply_mask:
                s = jnp.where(causal, s, -1.0e10)   # matches w*b - 1e10*(1-b)

            m_prev = m_ref[h]          # (tq, 1) f32
            l_prev = l_ref[h]          # (tq, 1) f32
            a_prev = acc_ref[h]        # (tq, d) f32

            m_new = jnp.maximum(m_prev, jnp.max(s, axis=-1, keepdims=True))
            alpha = jnp.exp(m_prev - m_new)
            p = jnp.exp(s - m_new)     # f32 softmax statistics

            l_ref[h] = alpha * l_prev + jnp.sum(p, axis=-1, keepdims=True)
            pv = jax.lax.dot_general(p.astype(mxu_dtype), v_h,
                                     (((1,), (0,)), ((), ())),
                                     preferred_element_type=jnp.float32)
            acc_ref[h] = alpha * a_prev + pv
            m_ref[h] = m_new

    # Interior tiles (entirely at/below the diagonal) skip the mask; only
    # diagonal-straddling tiles pay the iota/compare/where VPU cost.  Tiles
    # entirely above the diagonal are skipped (and their DMA is elided by the
    # clamped index_map in the wrapper).
    needed = k_start <= q_start + (tq - 1)
    interior = (k_start + (tkv - 1)) <= q_start
    diagonal = jnp.logical_and(needed, jnp.logical_not(interior))

    @pl.when(interior)
    def _interior():
        _body(apply_mask=False)

    @pl.when(diagonal)
    def _diagonal():
        _body(apply_mask=True)

    @pl.when(ki == pl.num_programs(2) - 1)
    def _finalize():
        outs = []
        for h in range(n_head):
            inv_l = pl.reciprocal(l_ref[h])   # exact (correctness review)
            outs.append(acc_ref[h] * inv_l)
        # One lane-dense (tq, nx) store with all heads merged (merge_heads fused).
        o_ref[0] = jnp.concatenate(outs, axis=-1).astype(o_ref.dtype)


def _attn_tiles(T, nx, n_head, d_head, act_itemsize, vmem_budget):
    """Pick (tq, tkv).  Keep tq >= 256 where possible (the QK^T contraction is
    only d_head wide, so the M/N dims and the P@V leg must carry MXU
    occupancy); shrink tkv until the double-buffered blocks + scratch fit the
    generation-aware budget."""
    tq = _tile(T, 256, 128)
    tkv = _tile(T, 512, 128)

    def footprint(tq_, tkv_):
        blocks = (2 * tq_ * nx        # q, double-buffered
                  + 4 * tkv_ * nx     # k + v, double-buffered
                  + 2 * tq_ * nx)     # out, double-buffered
        scratch = tq_ * nx            # scaled q slab
        stats = n_head * tq_ * (d_head + 2) * 4   # f32 m / l / acc
        return (blocks + scratch) * act_itemsize + stats

    while tkv > 128 and footprint(tq, tkv) > 0.7 * vmem_budget:
        new_tkv = _tile(T, max(tkv // 2, 128), 128)
        if new_tkv >= tkv:
            break
        tkv = new_tkv
    return tq, tkv


def attention(qkv, *, n_head, scale, mxu_dtype=jnp.bfloat16,
              tq=None, tkv=None, vmem_limit=None):
    """qkv: (B, T, 3, nx) -> (B, T, nx) causal self-attention output."""
    B, T, three, nx = qkv.shape
    assert three == 3
    d = nx // n_head
    vmem_limit = vmem_limit or _vmem_limit_bytes()
    itemsize = jnp.dtype(qkv.dtype).itemsize
    tq0, tkv0 = _attn_tiles(T, nx, n_head, d, itemsize, vmem_limit)
    tq = tq or tq0
    tkv = tkv or tkv0
    grid = (B, T // tq, T // tkv)

    def _last_kv(qi):
        # Last kv block index that contains any unmasked column for q tile qi.
        return (qi * tq + tq - 1) // tkv

    # Clamp the kv block index for fully-masked steps: the index_map then
    # repeats the previous block index, so Pallas elides the K/V DMA entirely
    # (the compute for those steps is skipped inside the kernel).
    def _k_map(b, qi, ki):
        return (b, jnp.minimum(ki, _last_kv(qi)), 1, 0)

    def _v_map(b, qi, ki):
        return (b, jnp.minimum(ki, _last_kv(qi)), 2, 0)

    kernel = functools.partial(
        _attn_kernel, n_head=n_head, d_head=d, scale=scale,
        mxu_dtype=mxu_dtype, tq=tq, tkv=tkv)

    # TODO(synk): on v7x, shard the batch axis across the two TensorCores
    # (CORE_PARALLEL / pl.core_map) once validated on single-core generations.
    return pl.pallas_call(
        kernel,
        out_shape=jax.ShapeDtypeStruct((B, T, nx), qkv.dtype),
        grid=grid,
        in_specs=[
            pl.BlockSpec((1, tq, 1, nx), lambda b, qi, ki: (b, qi, 0, 0)),   # q
            pl.BlockSpec((1, tkv, 1, nx), _k_map),                           # k
            pl.BlockSpec((1, tkv, 1, nx), _v_map),                           # v
        ],
        out_specs=pl.BlockSpec((1, tq, nx), lambda b, qi, ki: (b, qi, 0)),
        scratch_shapes=[
            pltpu.VMEM((tq, nx), mxu_dtype),            # scaled q slab (hoisted)
            pltpu.VMEM((n_head, tq, 1), jnp.float32),   # running max
            pltpu.VMEM((n_head, tq, 1), jnp.float32),   # running denominator
            pltpu.VMEM((n_head, tq, d), jnp.float32),   # running numerator
        ],
        compiler_params=pltpu.CompilerParams(
            dimension_semantics=("parallel", "parallel", "arbitrary"),
            vmem_limit_bytes=vmem_limit),
    )(qkv, qkv, qkv)


# ----------------------------------------------------------------------------
# Module wrapper (parameter init + glue reshapes in plain JAX)
# ----------------------------------------------------------------------------
class MultiheadAttentionPallas:
    def __init__(self, nx, n_ctx, n_head, scale=False, *, key,
                 param_dtype=jnp.bfloat16, mxu_dtype=jnp.bfloat16):
        assert nx % n_head == 0
        self.nx = nx
        self.n_ctx = n_ctx
        self.n_head = n_head
        self.scale = scale
        self.mxu_dtype = mxu_dtype
        k1, k2 = jax.random.split(key)
        # Matches nn.init.normal_(std=0.02) / zero bias.  c_attn weight stored
        # exactly as the reference (nx, 3*nx); bf16 at rest halves weight DMA.
        self.c_attn_w = (0.02 * jax.random.normal(k1, (nx, 3 * nx), jnp.float32)
                         ).astype(param_dtype)
        self.c_attn_b = jnp.zeros((3 * nx,), jnp.float32)
        self.c_proj_w = (0.02 * jax.random.normal(k2, (nx, nx), jnp.float32)
                         ).astype(param_dtype)
        self.c_proj_b = jnp.zeros((nx,), jnp.float32)

    def __call__(self, x, layer_past=None, attn_mask=None):
        # TODO(synk): layer_past / attn_mask paths not implemented (both None here).
        B, T, nx = x.shape
        H = self.n_head
        d = nx // H
        vmem_limit = _vmem_limit_bytes()
        act_dtype = jnp.bfloat16   # intermediates at rest

        # Fused qkv projection: one (M, 3*nx) lane-dense matmul.
        qkv = conv1d(x.reshape(-1, nx), self.c_attn_w, self.c_attn_b,
                     mxu_dtype=self.mxu_dtype, out_dtype=act_dtype,
                     vmem_limit=vmem_limit)
        qkv = qkv.reshape(B, T, 3, nx)      # free metadata reshape

        # present = stack((key.transpose(-2,-1), value)) -> (2, B, H, T, d).
        # (Kept bf16, consistent with the bf16-at-rest KV stream.)
        k4 = qkv[:, :, 1].reshape(B, T, H, d).transpose(0, 2, 1, 3)
        v4 = qkv[:, :, 2].reshape(B, T, H, d).transpose(0, 2, 1, 3)
        present = jnp.stack((k4, v4))

        # Fused split-heads + causal flash attention + merge-heads.
        a = attention(qkv, n_head=H, scale=self.scale,
                      mxu_dtype=self.mxu_dtype, vmem_limit=vmem_limit)  # (B,T,nx)

        # Output projection (back to the input dtype).
        out = conv1d(a.reshape(-1, nx), self.c_proj_w, self.c_proj_b,
                     mxu_dtype=self.mxu_dtype, out_dtype=x.dtype,
                     vmem_limit=vmem_limit)
        return out.reshape(B, T, nx), present


if __name__ == "__main__":
    B, T, NX, NHEAD = 2, 8, 32, 4   # n_ctx == T == 8, d_head == 8
    key = jax.random.PRNGKey(0)
    kparam, kx = jax.random.split(key)

    mha = MultiheadAttentionPallas(nx=NX, n_ctx=T, n_head=NHEAD, scale=True, key=kparam)
    x = jax.random.normal(kx, (B, T, NX), jnp.float32)

    attn_out, present = mha(x)
    jax.block_until_ready((attn_out, present))

    assert attn_out.shape == (B, T, NX)
    assert present.shape == (2, B, NHEAD, T, NX // NHEAD)
    print("KERNEL_OK")
</pallas_src>

<mosaic_0001>
module attributes {stable_mosaic.version = 11 : i64} {
  func.func @_matmul_bias_kernel(%arg0: i32, %arg1: i32, %arg2: i32, %arg3: memref<16x32xf32, #tpu.memory_space<vmem>>, %arg4: memref<32x96xbf16, #tpu.memory_space<vmem>>, %arg5: memref<1x96xf32, #tpu.memory_space<vmem>>, %arg6: memref<16x96xbf16, #tpu.memory_space<vmem>>, %arg7: memref<16x96xf32, #tpu.memory_space<vmem>>) attributes {dimension_semantics = [#tpu.dimension_semantics<parallel>, #tpu.dimension_semantics<parallel>, #tpu.dimension_semantics<arbitrary>], iteration_bounds = array<i64: 1, 1, 1>, scalar_prefetch = 0 : i64, scratch_operands = 1 : i64, tpu.core_type = #tpu.core_type<tc>, window_params = [{transform_indices = @transform_0, window_bounds = array<i64: 16, 32>}, {transform_indices = @transform_1, window_bounds = array<i64: 32, 96>}, {transform_indices = @transform_2, window_bounds = array<i64: 1, 96>}, {transform_indices = @transform_3, window_bounds = array<i64: 16, 96>}]} {
    %c0_i32 = arith.constant 0 : i32
    %0 = arith.cmpi eq, %arg2, %c0_i32 : i32
    %1 = arith.extui %0 : i1 to i32
    %c0_i32_0 = arith.constant 0 : i32
    %2 = arith.cmpi ne, %1, %c0_i32_0 : i32
    scf.if %2 {
      %cst_10 = arith.constant 0.000000e+00 : f32
      %13 = vector.broadcast %cst_10 : f32 to vector<16x96xf32>
      %c0_11 = arith.constant 0 : index
      %c0_12 = arith.constant 0 : index
      %14 = vector.load %arg7[%c0_11, %c0_12] : memref<16x96xf32, #tpu.memory_space<vmem>>, vector<16x96xf32>
      tpu.vector_store %arg7[%c0_11, %c0_12], %13 {strides = array<i32>} : memref<16x96xf32, #tpu.memory_space<vmem>>, vector<16x96xf32>,
    } else {
    }
    %c0 = arith.constant 0 : index
    %c0_1 = arith.constant 0 : index
    %3 = vector.load %arg7[%c0, %c0_1] : memref<16x96xf32, #tpu.memory_space<vmem>>, vector<16x96xf32>
    %c0_2 = arith.constant 0 : index
    %c0_3 = arith.constant 0 : index
    %4 = vector.load %arg3[%c0_2, %c0_3] : memref<16x32xf32, #tpu.memory_space<vmem>>, vector<16x32xf32>
    %5 = arith.truncf %4 : vector<16x32xf32> to vector<16x32xbf16>
    %c0_4 = arith.constant 0 : index
    %c0_5 = arith.constant 0 : index
    %6 = vector.load %arg4[%c0_4, %c0_5] : memref<32x96xbf16, #tpu.memory_space<vmem>>, vector<32x96xbf16>
    %cst = arith.constant dense<0.000000e+00> : vector<16x96xf32>
    %7 = tpu.matmul %5, %6, %cst {dimension_numbers = #tpu.dot_dimension_numbers<[1], [0], [0], [1], [0, 0, 1, 1], [], []>} : vector<16x32xbf16>, vector<32x96xbf16>, vector<16x96xf32> -> vector<16x96xf32>
    %8 = arith.addf %3, %7 : vector<16x96xf32>
    %c0_6 = arith.constant 0 : index
    %c0_7 = arith.constant 0 : index
    %9 = vector.load %arg7[%c0_6, %c0_7] : memref<16x96xf32, #tpu.memory_space<vmem>>, vector<16x96xf32>
    tpu.vector_store %arg7[%c0_6, %c0_7], %8 {strides = array<i32>} : memref<16x96xf32, #tpu.memory_space<vmem>>, vector<16x96xf32>,
    %c0_i32_8 = arith.constant 0 : i32
    %10 = arith.cmpi eq, %arg2, %c0_i32_8 : i32
    %11 = arith.extui %10 : i1 to i32
    %c0_i32_9 = arith.constant 0 : i32
    %12 = arith.cmpi ne, %11, %c0_i32_9 : i32
    scf.if %12 {
      %c0_10 = arith.constant 0 : index
      %c0_11 = arith.constant 0 : index
      %13 = vector.load %arg7[%c0_10, %c0_11] : memref<16x96xf32, #tpu.memory_space<vmem>>, vector<16x96xf32>
      %c0_12 = arith.constant 0 : index
      %c0_13 = arith.constant 0 : index
      %14 = vector.load %arg5[%c0_12, %c0_13] : memref<1x96xf32, #tpu.memory_space<vmem>>, vector<1x96xf32>
      %15 = vector.broadcast %14 : vector<1x96xf32> to vector<16x96xf32>
      %16 = arith.addf %13, %15 : vector<16x96xf32>
      %17 = arith.truncf %16 : vector<16x96xf32> to vector<16x96xbf16>
      %c0_14 = arith.constant 0 : index
      %c0_15 = arith.constant 0 : index
      %18 = vector.load %arg6[%c0_14, %c0_15] : memref<16x96xbf16, #tpu.memory_space<vmem>>, vector<16x96xbf16>
      tpu.vector_store %arg6[%c0_14, %c0_15], %17 {strides = array<i32>} : memref<16x96xbf16, #tpu.memory_space<vmem>>, vector<16x96xbf16>,
    } else {
    }
    return
  }
  func.func @transform_0(%arg0: i32, %arg1: i32, %arg2: i32) -> (i32, i32) {
    %c0_i32 = arith.constant 0 : i32
    return %arg0, %arg2 : i32, i32
  }
  func.func @transform_1(%arg0: i32, %arg1: i32, %arg2: i32) -> (i32, i32) {
    %c0_i32 = arith.constant 0 : i32
    return %arg2, %arg1 : i32, i32
  }
  func.func @transform_2(%arg0: i32, %arg1: i32, %arg2: i32) -> (i32, i32) {
    %c0_i32 = arith.constant 0 : i32
    %c0_i32_0 = arith.constant 0 : i32
    return %c0_i32, %arg1 : i32, i32
  }
  func.func @transform_3(%arg0: i32, %arg1: i32, %arg2: i32) -> (i32, i32) {
    %c0_i32 = arith.constant 0 : i32
    return %arg0, %arg1 : i32, i32
  }
}

</mosaic_0001>

<llo_original>
// kernel: tpu_custom_call.1
$region0: #{tpu_custom_call.1}
  #allocation0 [shape = 'u32[]', space=smem, size = 0x4, offset = 0x4, fixed_abs, tag = 'smem constant byte address 0x4 - core index']
  #allocation1 [shape = 'u32[72,128]{1,0:T(1,128)}', space=vmem, size = 0x9000, scoped, tag = 'internal scratch']
  #allocation2 [shape = 'f32[16,96]{1,0:T(8,128)}', space=vmem, size = 0x2000, scoped, tag = 'scratch operand']
  %s0 = inlined_call_operand.hbm [shape: f32[16,32], index: 0, kind: input, shape index: {}]
  %s1 = inlined_call_operand.hbm [shape: bf16[32,96], index: 1, kind: input, shape index: {}]
  %s2 = inlined_call_operand.vmem [shape: f32[1,96], index: 2, kind: input, shape index: {}]
  %s3 = inlined_call_operand.hbm [shape: bf16[16,96], index: 3, kind: output, shape index: {}]
  %s4 = sld [smem:[#allocation0]]
  $region38: #{tpu_custom_call.1} parent=0
    _
  %s6 = ssub.s32 1, %s4
  %s7 = scalar_select 0, %s6, %s4
  $region1: #{tpu_custom_call.1} parent=0
    #allocation3 [shape = 'u8[8192]{0}', space=vmem, size = 0x2000, scoped, tag = 'input window, operand 0, single buffered']
    #allocation4 [shape = 's32[1]{0}', space=sflag, size = 0x4, scoped, tag = 'scoped memory for tpu_custom_call.1']
    #allocation5 [shape = 's32[1]{0}', space=sflag, size = 0x4, scoped, tag = 'scoped memory for tpu_custom_call.1']
    #allocation6 [shape = 'u8[8192]{0}', space=vmem, size = 0x2000, scoped, tag = 'input window, operand 1, single buffered']
    #allocation7 [shape = 's32[1]{0}', space=sflag, size = 0x4, scoped, tag = 'scoped memory for tpu_custom_call.1']
    #allocation8 [shape = 'u8[4096]{0}', space=vmem, size = 0x1000, scoped, tag = 'output window, operand 0, single buffered']
    %8 = vsyncpa [#allocation4], 0
    %9 = vsyncpa [#allocation7], 0
    %10 = vsyncpa [#allocation5], 0
    // Predicated region
    $region2: #{tpu_custom_call.1} parent=1 // pred_check
      _
    $region3: #{tpu_custom_call.1} parent=1 // pred_check_branch
      %12 = sbr.rel (0) target = $region5
    $region4: #{tpu_custom_call.1} parent=1 // pred_region
      %14 = vsyncadd [#allocation4], 0
      %s15 = sshll.u32 %s0, 4
      %s16 = int_to_ptr.hbm [resolvable:$true] %s15
      %s17 = sshll.u32 [#allocation3], 4
      %s18 = int_to_ptr.vmem [resolvable:$true] %s17
      %23 = dma.hbm_to_vmem [thread:$0]  %s16, 256, %s18, [#allocation4], 128, 128, 8
    $region5: #{tpu_custom_call.1} parent=1 // pred_fallthru
      _
    // Predicated region
    $region6: #{tpu_custom_call.1} parent=1 // pred_check
      _
    $region7: #{tpu_custom_call.1} parent=1 // pred_check_branch
      %25 = sbr.rel (0) target = $region9
    $region8: #{tpu_custom_call.1} parent=1 // pred_region
      %27 = vsyncadd [#allocation7], 0
      %s28 = sshll.u32 %s1, 4
      %s29 = int_to_ptr.hbm [resolvable:$true] %s28
      %s30 = sshll.u32 [#allocation6], 4
      %s31 = int_to_ptr.vmem [resolvable:$true] %s30
      %36 = dma.hbm_to_vmem [thread:$0]  %s29, 256, %s31, [#allocation7], 64, 64, 4
    $region9: #{tpu_custom_call.1} parent=1 // pred_fallthru
      _
    // Predicated region
    $region10: #{tpu_custom_call.1} parent=1 // pred_check
      _
    $region11: #{tpu_custom_call.1} parent=1 // pred_check_branch
      %38 = sbr.rel (0) target = $region13
    $region12: #{tpu_custom_call.1} parent=1 // pred_region
      _
    $region13: #{tpu_custom_call.1} parent=1 // pred_fallthru
      _
    // Predicated region
    $region14: #{tpu_custom_call.1} parent=1 // pred_check
      _
    $region15: #{tpu_custom_call.1} parent=1 // pred_check_branch
      %40 = sbr.rel (0) target = $region17
    $region16: #{tpu_custom_call.1} parent=1 // pred_region
      %42 = dma.done [#allocation4], 256
    $region17: #{tpu_custom_call.1} parent=1 // pred_fallthru
      _
    // Predicated region
    $region18: #{tpu_custom_call.1} parent=1 // pred_check
      _
    $region19: #{tpu_custom_call.1} parent=1 // pred_check_branch
      %44 = sbr.rel (0) target = $region21
    $region20: #{tpu_custom_call.1} parent=1 // pred_region
      %46 = dma.done [#allocation7], 256
    $region21: #{tpu_custom_call.1} parent=1 // pred_fallthru
      _
    %p48 = scmp.eq.s32.totalorder 0, 0
    // Predicated region
    $region22: #{tpu_custom_call.1} parent=1 // pred_check
      %p49 = pneg %p48
    $region23: #{tpu_custom_call.1} parent=1 // pred_check_branch
      %51 = sbr.rel (%p49) target = $region25
    $region24: #{tpu_custom_call.1} parent=1 // pred_region
      %vm52 = vcmask 785408
      %53 = vst.msk [vmem:[#allocation2] sm:$0xff] %vm52, 0.0
      %54 = vst.msk [vmem:[#allocation2 + $0x8] sm:$0xff] %vm52, 0.0
    $region25: #{tpu_custom_call.1} parent=1 // pred_fallthru
      _
    %v55 = vld [vmem:[#allocation2] sm:$0xff]
    %v56 = vld [vmem:[#allocation2 + $0x8] sm:$0xff]
    %v57 = vld [vmem:[#allocation3] sm:$0xff]
    %v58 = vld [vmem:[#allocation3 + $0x8] sm:$0xff]
    %v59 = vpack.c.bf16 %v58, %v57
    %v60 = vld [vmem:[#allocation6] sm:$0xf]
    %v61 = vld [vmem:[#allocation6 + $0x4] sm:$0xf]
    %v62 = vld [vmem:[#allocation6 + $0x8] sm:$0xf]
    %v63 = vld [vmem:[#allocation6 + $0xc] sm:$0xf]
    %v68 = vunpack.c.l.b16 %v60
    %v69 = vunpack.c.l.b16 %v61
    %v70 = vunpack.c.l.b16 %v62
    %v71 = vunpack.c.l.b16 %v63
    %v72 = vpack.c.b16 %v69, %v68
    %v73 = vpack.c.b16 %v71, %v70
    %vm76 = vcmask 261120
    %v78 = vsel %vm76, %v59, 0
    %80 = vmatpush.bf16.msra.mxu0 0
    %81 = vmatpush.bf16.msra.mxu0 0
    %82 = vmatpush.bf16.msra.mxu0 0
    %83 = vmatpush.bf16.msra.mxu0 0
    %84 = vmatpush.bf16.msra.mxu0 0
    %85 = vmatpush.bf16.msra.mxu0 0
    %86 = vmatpush.bf16.msra.mxu0 %v73
    %87 = vmatpush.bf16.msra.mxu0 %v72
    %88 = vmatmul.bf16.gmra.mxu0 %v78
    %v89 = vpop.f32.mrf.mxu0
    %v90 = vadd.f32 0.0, %v89
    %v91 = vpop.f32.mrf.mxu0
    %v92 = vadd.f32 0.0, %v91
    %93 = vdwg.mxu0
    %v94 = vadd.f32 %v55, %v90
    %v95 = vadd.f32 %v56, %v92
    %vm96 = vcmask 785408
    %97 = vst.msk [vmem:[#allocation2] sm:$0xff] %vm96, %v94
    %98 = vst.msk [vmem:[#allocation2 + $0x8] sm:$0xff] %vm96, %v95
    // Predicated region
    $region26: #{tpu_custom_call.1} parent=1 // pred_check
      %p99 = pneg %p48
    $region27: #{tpu_custom_call.1} parent=1 // pred_check_branch
      %101 = sbr.rel (%p99) target = $region29
    $region28: #{tpu_custom_call.1} parent=1 // pred_region
      %v102 = vld [vmem:[#allocation2] sm:$0xff]
      %v103 = vld [vmem:[#allocation2 + $0x8] sm:$0xff]
      %v104 = vld [vmem:[%s2] sm:$0x1]
      %v106 = vperm.slane %v104, 0
      %v108 = vadd.f32 %v102, %v106
      %v109 = vadd.f32 %v103, %v106
      %v110 = vpack.c.bf16 %v108, %v108
      %v111 = vpack.c.bf16 %v109, %v109
      %vm112 = vcmask 781312
      %113 = vst.msk [vmem:[#allocation8] sm:$0xf] %vm112, %v110
      %114 = vst.msk [vmem:[#allocation8 + $0x4] sm:$0xf] %vm112, %v111
    $region29: #{tpu_custom_call.1} parent=1 // pred_fallthru
      _
    // Predicated region
    $region30: #{tpu_custom_call.1} parent=1 // pred_check
      _
    $region31: #{tpu_custom_call.1} parent=1 // pred_check_branch
      %116 = sbr.rel (0) target = $region33
    $region32: #{tpu_custom_call.1} parent=1 // pred_region
      %118 = vsyncadd [#allocation5], 0
      %s119 = sshll.u32 [#allocation8], 4
      %s120 = int_to_ptr.vmem [resolvable:$true] %s119
      %s121 = sshll.u32 %s3, 4
      %s122 = int_to_ptr.hbm [resolvable:$true] %s121
      %127 = dma.vmem_to_hbm [thread:$0]  %s120, 128, %s122, [#allocation5], 64, 64, 4
    $region33: #{tpu_custom_call.1} parent=1 // pred_fallthru
      _
    // Predicated region
    $region34: #{tpu_custom_call.1} parent=1 // pred_check
      _
    $region35: #{tpu_custom_call.1} parent=1 // pred_check_branch
      %129 = sbr.rel (0) target = $region37
    $region36: #{tpu_custom_call.1} parent=1 // pred_region
      %131 = dma.done [#allocation5], 128
    $region37: #{tpu_custom_call.1} parent=1 // pred_fallthru
      _
    %132 = vsyncpa [#allocation4], 1
    %133 = vsyncpa [#allocation7], 1
    %134 = vsyncpa [#allocation5], 1

</llo_original>
